<compile_context>
chip_gen: v7x
topology: tpu7x:2x2x1
jax: 0.10.0
libtpu: 0.0.40
codegen_flags: <defaults>
</compile_context>

<pallas_src>
import functools

import jax
import jax.numpy as jnp
from jax.experimental import pallas as pl
from jax.experimental.pallas import tpu as pltpu


def _mlp_kernel(x_ref, w1_ref, b1_ref, w2_ref, b2_ref, w3_ref, b3_ref, o_ref):
    # All three matmuls + sigmoids fused in one grid step over a batch tile.
    x = x_ref[...]                                                   # (bb, d_in), compute dtype
    h1 = jnp.dot(x, w1_ref[...], preferred_element_type=jnp.float32) + b1_ref[...]
    h1 = jax.nn.sigmoid(h1)                                          # f32 (EUP/VPU)
    h2 = jnp.dot(h1.astype(w2_ref.dtype), w2_ref[...],
                 preferred_element_type=jnp.float32) + b2_ref[...]
    h2 = jax.nn.sigmoid(h2)
    out = jnp.dot(h2.astype(w3_ref.dtype), w3_ref[...],
                  preferred_element_type=jnp.float32) + b3_ref[...]
    o_ref[...] = out.astype(o_ref.dtype)


def _effective_block_b(batch, requested):
    """Pick the batch tile: as large as requested, but keep >=2 parallel grid steps when the
    batch allows it (so v7x megacore has work for both TensorCores)."""
    if batch <= requested:
        if batch >= 16 and batch % 16 == 0:
            return batch // 2
        return batch
    # Round requested down to sublane granularity (8).
    return max(8, (requested // 8) * 8)


@functools.partial(jax.jit, static_argnames=("block_b", "compute_dtype"))
def linear_regression_forward(x, params, *, block_b=256, compute_dtype=jnp.bfloat16):
    """x: (B, input_size) float32. params: dict of w1,b1,w2,b2,w3,b3 (weights as (in, out))."""
    w1 = params["w1"].astype(compute_dtype)
    w2 = params["w2"].astype(compute_dtype)
    w3 = params["w3"].astype(compute_dtype)
    # Biases as (1, N) f32 so they broadcast cleanly inside the kernel (2-D tiles, f32 math).
    b1 = params["b1"].astype(jnp.float32).reshape(1, -1)
    b2 = params["b2"].astype(jnp.float32).reshape(1, -1)
    b3 = params["b3"].astype(jnp.float32).reshape(1, -1)
    xc = x.astype(compute_dtype)

    B, d_in = x.shape
    n1, n2, d_out = w1.shape[1], w2.shape[1], w3.shape[1]

    bb = _effective_block_b(B, block_b)
    grid = (pl.cdiv(B, bb),)

    return pl.pallas_call(
        _mlp_kernel,
        out_shape=jax.ShapeDtypeStruct((B, d_out), jnp.float32),
        grid_spec=pltpu.PrefetchScalarGridSpec(
            num_scalar_prefetch=0,
            grid=grid,
            in_specs=[
                # Batch tile of x (only operand that changes across grid steps).
                pl.BlockSpec((bb, d_in), lambda i: (i, 0)),
                # Weights / biases: full arrays, constant index_map -> DMA'd once, kept resident.
                pl.BlockSpec((d_in, n1), lambda i: (0, 0)),
                pl.BlockSpec((1, n1), lambda i: (0, 0)),
                pl.BlockSpec((n1, n2), lambda i: (0, 0)),
                pl.BlockSpec((1, n2), lambda i: (0, 0)),
                pl.BlockSpec((n2, d_out), lambda i: (0, 0)),
                pl.BlockSpec((1, d_out), lambda i: (0, 0)),
            ],
            out_specs=pl.BlockSpec((bb, d_out), lambda i: (i, 0)),
        ),
        compiler_params=pltpu.CompilerParams(
            dimension_semantics=("parallel",),
        ),
    )(xc, w1, b1, w2, b2, w3, b3)


def init_params(key, input_size, output_size):
    """Deterministic init mimicking nn.Linear's U(-1/sqrt(fan_in), 1/sqrt(fan_in))."""
    sizes = [(input_size, 64), (64, 32), (32, output_size)]
    params = {}
    for idx, (fan_in, fan_out) in enumerate(sizes, start=1):
        key, kw, kb = jax.random.split(key, 3)
        bound = 1.0 / (fan_in ** 0.5)
        params[f"w{idx}"] = jax.random.uniform(
            kw, (fan_in, fan_out), jnp.float32, minval=-bound, maxval=bound
        )
        params[f"b{idx}"] = jax.random.uniform(
            kb, (fan_out,), jnp.float32, minval=-bound, maxval=bound
        )
    return params


def reference_forward(x, params, compute_dtype=jnp.bfloat16):
    """Pure-JAX reference with the same bf16-input / f32-accumulate recipe as the kernel."""
    cd = compute_dtype
    h1 = jnp.dot(x.astype(cd), params["w1"].astype(cd),
                 preferred_element_type=jnp.float32) + params["b1"]
    h1 = jax.nn.sigmoid(h1)
    h2 = jnp.dot(h1.astype(cd), params["w2"].astype(cd),
                 preferred_element_type=jnp.float32) + params["b2"]
    h2 = jax.nn.sigmoid(h2)
    return jnp.dot(h2.astype(cd), params["w3"].astype(cd),
                   preferred_element_type=jnp.float32) + params["b3"]


if __name__ == "__main__":
    key = jax.random.PRNGKey(0)
    batch, input_size, output_size = 32, 16, 4

    k_x, k_p = jax.random.split(key)
    x = jax.random.normal(k_x, (batch, input_size), jnp.float32)
    params = init_params(k_p, input_size, output_size)

    out = linear_regression_forward(x, params)   # batch=32 -> bb=16 -> 2 parallel grid steps
    out = jax.block_until_ready(out)

    ref = reference_forward(x, params)
    assert out.shape == (batch, output_size), out.shape
    assert jnp.allclose(out, ref, atol=5e-3, rtol=5e-3), (
        float(jnp.max(jnp.abs(out - ref)))
    )
    print("KERNEL_OK")
</pallas_src>

<mosaic_0001>
module attributes {stable_mosaic.version = 11 : i64} {
  func.func @_mlp_kernel(%arg0: i32, %arg1: memref<16x16xbf16, #tpu.memory_space<vmem>>, %arg2: memref<16x64xbf16, #tpu.memory_space<vmem>>, %arg3: memref<1x64xf32, #tpu.memory_space<vmem>>, %arg4: memref<64x32xbf16, #tpu.memory_space<vmem>>, %arg5: memref<1x32xf32, #tpu.memory_space<vmem>>, %arg6: memref<32x4xbf16, #tpu.memory_space<vmem>>, %arg7: memref<1x4xf32, #tpu.memory_space<vmem>>, %arg8: memref<16x4xf32, #tpu.memory_space<vmem>>) attributes {dimension_semantics = [#tpu.dimension_semantics<parallel>], iteration_bounds = array<i64: 2>, scalar_prefetch = 0 : i64, scratch_operands = 0 : i64, tpu.core_type = #tpu.core_type<tc>, window_params = [{transform_indices = @transform_0, window_bounds = array<i64: 16, 16>}, {pipeline_mode = #tpu.pipeline_mode<synchronous>, transform_indices = @transform_1, window_bounds = array<i64: 16, 64>}, {pipeline_mode = #tpu.pipeline_mode<synchronous>, transform_indices = @transform_2, window_bounds = array<i64: 1, 64>}, {pipeline_mode = #tpu.pipeline_mode<synchronous>, transform_indices = @transform_3, window_bounds = array<i64: 64, 32>}, {pipeline_mode = #tpu.pipeline_mode<synchronous>, transform_indices = @transform_4, window_bounds = array<i64: 1, 32>}, {pipeline_mode = #tpu.pipeline_mode<synchronous>, transform_indices = @transform_5, window_bounds = array<i64: 32, 4>}, {pipeline_mode = #tpu.pipeline_mode<synchronous>, transform_indices = @transform_6, window_bounds = array<i64: 1, 4>}, {transform_indices = @transform_7, window_bounds = array<i64: 16, 4>}]} {
    %c0 = arith.constant 0 : index
    %c0_0 = arith.constant 0 : index
    %0 = vector.load %arg1[%c0, %c0_0] : memref<16x16xbf16, #tpu.memory_space<vmem>>, vector<16x16xbf16>
    %c0_1 = arith.constant 0 : index
    %c0_2 = arith.constant 0 : index
    %1 = vector.load %arg2[%c0_1, %c0_2] : memref<16x64xbf16, #tpu.memory_space<vmem>>, vector<16x64xbf16>
    %cst = arith.constant dense<0.000000e+00> : vector<16x64xf32>
    %2 = tpu.matmul %0, %1, %cst {dimension_numbers = #tpu.dot_dimension_numbers<[1], [0], [0], [1], [0, 0, 1, 1], [], []>} : vector<16x16xbf16>, vector<16x64xbf16>, vector<16x64xf32> -> vector<16x64xf32>
    %c0_3 = arith.constant 0 : index
    %c0_4 = arith.constant 0 : index
    %3 = vector.load %arg3[%c0_3, %c0_4] : memref<1x64xf32, #tpu.memory_space<vmem>>, vector<1x64xf32>
    %4 = vector.broadcast %3 : vector<1x64xf32> to vector<16x64xf32>
    %5 = arith.addf %2, %4 : vector<16x64xf32>
    %6 = arith.negf %5 : vector<16x64xf32>
    %7 = math.exp %6 : vector<16x64xf32>
    %cst_5 = arith.constant 1.000000e+00 : f32
    %8 = vector.broadcast %cst_5 : f32 to vector<16x64xf32>
    %9 = arith.addf %8, %7 : vector<16x64xf32>
    %10 = arith.divf %8, %9 : vector<16x64xf32>
    %11 = arith.truncf %10 : vector<16x64xf32> to vector<16x64xbf16>
    %c0_6 = arith.constant 0 : index
    %c0_7 = arith.constant 0 : index
    %12 = vector.load %arg4[%c0_6, %c0_7] : memref<64x32xbf16, #tpu.memory_space<vmem>>, vector<64x32xbf16>
    %cst_8 = arith.constant dense<0.000000e+00> : vector<16x32xf32>
    %13 = tpu.matmul %11, %12, %cst_8 {dimension_numbers = #tpu.dot_dimension_numbers<[1], [0], [0], [1], [0, 0, 1, 1], [], []>} : vector<16x64xbf16>, vector<64x32xbf16>, vector<16x32xf32> -> vector<16x32xf32>
    %c0_9 = arith.constant 0 : index
    %c0_10 = arith.constant 0 : index
    %14 = vector.load %arg5[%c0_9, %c0_10] : memref<1x32xf32, #tpu.memory_space<vmem>>, vector<1x32xf32>
    %15 = vector.broadcast %14 : vector<1x32xf32> to vector<16x32xf32>
    %16 = arith.addf %13, %15 : vector<16x32xf32>
    %17 = arith.negf %16 : vector<16x32xf32>
    %18 = math.exp %17 : vector<16x32xf32>
    %cst_11 = arith.constant 1.000000e+00 : f32
    %19 = vector.broadcast %cst_11 : f32 to vector<16x32xf32>
    %20 = arith.addf %19, %18 : vector<16x32xf32>
    %21 = arith.divf %19, %20 : vector<16x32xf32>
    %22 = arith.truncf %21 : vector<16x32xf32> to vector<16x32xbf16>
    %c0_12 = arith.constant 0 : index
    %c0_13 = arith.constant 0 : index
    %23 = vector.load %arg6[%c0_12, %c0_13] : memref<32x4xbf16, #tpu.memory_space<vmem>>, vector<32x4xbf16>
    %cst_14 = arith.constant dense<0.000000e+00> : vector<16x4xf32>
    %24 = tpu.matmul %22, %23, %cst_14 {dimension_numbers = #tpu.dot_dimension_numbers<[1], [0], [0], [1], [0, 0, 1, 1], [], []>} : vector<16x32xbf16>, vector<32x4xbf16>, vector<16x4xf32> -> vector<16x4xf32>
    %c0_15 = arith.constant 0 : index
    %c0_16 = arith.constant 0 : index
    %25 = vector.load %arg7[%c0_15, %c0_16] : memref<1x4xf32, #tpu.memory_space<vmem>>, vector<1x4xf32>
    %26 = vector.broadcast %25 : vector<1x4xf32> to vector<16x4xf32>
    %27 = arith.addf %24, %26 : vector<16x4xf32>
    %c0_17 = arith.constant 0 : index
    %c0_18 = arith.constant 0 : index
    %28 = vector.load %arg8[%c0_17, %c0_18] : memref<16x4xf32, #tpu.memory_space<vmem>>, vector<16x4xf32>
    tpu.vector_store %arg8[%c0_17, %c0_18], %27 {strides = array<i32>} : memref<16x4xf32, #tpu.memory_space<vmem>>, vector<16x4xf32>,
    return
  }
  func.func @transform_0(%arg0: i32) -> (i32, i32) {
    %c0_i32 = arith.constant 0 : i32
    %c0_i32_0 = arith.constant 0 : i32
    return %arg0, %c0_i32 : i32, i32
  }
  func.func @transform_1(%arg0: i32) -> (i32, i32) {
    %c0_i32 = arith.constant 0 : i32
    %c0_i32_0 = arith.constant 0 : i32
    %c0_i32_1 = arith.constant 0 : i32
    return %c0_i32, %c0_i32_0 : i32, i32
  }
  func.func @transform_2(%arg0: i32) -> (i32, i32) {
    %c0_i32 = arith.constant 0 : i32
    %c0_i32_0 = arith.constant 0 : i32
    %c0_i32_1 = arith.constant 0 : i32
    return %c0_i32, %c0_i32_0 : i32, i32
  }
  func.func @transform_3(%arg0: i32) -> (i32, i32) {
    %c0_i32 = arith.constant 0 : i32
    %c0_i32_0 = arith.constant 0 : i32
    %c0_i32_1 = arith.constant 0 : i32
    return %c0_i32, %c0_i32_0 : i32, i32
  }
  func.func @transform_4(%arg0: i32) -> (i32, i32) {
    %c0_i32 = arith.constant 0 : i32
    %c0_i32_0 = arith.constant 0 : i32
    %c0_i32_1 = arith.constant 0 : i32
    return %c0_i32, %c0_i32_0 : i32, i32
  }
  func.func @transform_5(%arg0: i32) -> (i32, i32) {
    %c0_i32 = arith.constant 0 : i32
    %c0_i32_0 = arith.constant 0 : i32
    %c0_i32_1 = arith.constant 0 : i32
    return %c0_i32, %c0_i32_0 : i32, i32
  }
  func.func @transform_6(%arg0: i32) -> (i32, i32) {
    %c0_i32 = arith.constant 0 : i32
    %c0_i32_0 = arith.constant 0 : i32
    %c0_i32_1 = arith.constant 0 : i32
    return %c0_i32, %c0_i32_0 : i32, i32
  }
  func.func @transform_7(%arg0: i32) -> (i32, i32) {
    %c0_i32 = arith.constant 0 : i32
    %c0_i32_0 = arith.constant 0 : i32
    return %arg0, %c0_i32 : i32, i32
  }
}

</mosaic_0001>

<llo_original>
// kernel: linear_regression_forward.1
$region0: #{linear_regression_forward.1}
  #allocation0 [shape = 'u32[]', space=smem, size = 0x4, offset = 0x4, fixed_abs, tag = 'smem constant byte address 0x4 - core index']
  #allocation1 [shape = 'u32[144,128]{1,0:T(1,128)}', space=vmem, size = 0x12000, scoped, tag = 'internal scratch']
  %s0 = inlined_call_operand.vmem [shape: bf16[32,16], index: 0, kind: input, shape index: {}]
  %s1 = inlined_call_operand.vmem [shape: bf16[16,64], index: 1, kind: input, shape index: {}]
  %s2 = inlined_call_operand.vmem [shape: f32[1,64], index: 2, kind: input, shape index: {}]
  %s3 = inlined_call_operand.vmem [shape: bf16[64,32], index: 3, kind: input, shape index: {}]
  %s4 = inlined_call_operand.vmem [shape: f32[1,32], index: 4, kind: input, shape index: {}]
  %s5 = inlined_call_operand.vmem [shape: bf16[32,4], index: 5, kind: input, shape index: {}]
  %s6 = inlined_call_operand.vmem [shape: f32[1,4], index: 6, kind: input, shape index: {}]
  %s7 = inlined_call_operand.vmem [shape: f32[32,4], index: 7, kind: output, shape index: {}]
  %s8 = sld [smem:[#allocation0]]
  $region61: #{linear_regression_forward.1} parent=0
    _
  %s10 = ssub.s32 1, %s8
  %s11 = scalar_select 0, %s10, %s8
  loop: start=0, step=1, limit=4
  $region2: #{linear_regression_forward.1} parent=0 // loop_pre_header
    _
  $region3: #{linear_regression_forward.1} parent=0 // loop_header
    %s13 = sphi 0, %s17
    %p14 = scmp.ge.s32.totalorder %s13, 4
    %s23 = sphi 0, %s25
    %s26 = sphi 0, %s23
    %s27 = sphi 0, %s26
    %s43 = sphi 0, %s27
    %s47 = sphi 0, %s47
    %s49 = sphi 0, %s47
    %s50 = sphi 0, %s49
    %s64 = sphi 0, %s50
    %s68 = sphi 0, %s68
    %s70 = sphi 0, %s68
    %s71 = sphi 0, %s70
    %s85 = sphi 0, %s71
    %s89 = sphi 0, %s89
    %s91 = sphi 0, %s89
    %s92 = sphi 0, %s91
    %s106 = sphi 0, %s92
    %s110 = sphi 0, %s110
    %s112 = sphi 0, %s110
    %s113 = sphi 0, %s112
    %s127 = sphi 0, %s113
    %s131 = sphi 0, %s131
    %s133 = sphi 0, %s131
    %s134 = sphi 0, %s133
    %s148 = sphi 0, %s134
    %s152 = sphi 0, %s152
    %s154 = sphi 0, %s152
    %s155 = sphi 0, %s154
    %s169 = sphi 0, %s155
    %s175 = sphi 0, %s177
    %s178 = sphi 0, %s175
    %s179 = sphi 0, %s178
    %s195 = sphi 0, %s179
  $region4: #{linear_regression_forward.1} parent=0 // loop_header_branch
    %16 = sbr.rel (%p14) target = $region8
  $region5: #{linear_regression_forward.1} parent=0 // loop_body
    %s18 = ssub.s32 %s13, 1
    %s19 = ssub.s32 %s13, 2
    %s20 = sadd.s32 %s13, 1
    %s21 = ssub.s32 %s13, %s20
    %p22 = scmp.eq.s32.totalorder %s21, 0
    %s24 = sadd.s32 %s23, 1
    %s25 = scalar_select %p22, %s23, %s24
    %p28 = pneg %p22
    %p29 = scmp.eq.s32.totalorder %s13, 1
    %p30 = por %p28, %p29
    %p31 = scmp.ne.s32.totalorder %s23, %s26
    %p32 = scmp.eq.s32.totalorder %s13, 0
    %p33 = por %p31, %p32
    %p34 = scmp.ne.s32.totalorder %s23, %s26
    %p35 = scmp.eq.s32.totalorder %s18, 1
    %p36 = por %p34, %p35
    %p37 = scmp.ne.s32.totalorder %s26, %s27
    %p38 = scmp.eq.s32.totalorder %s18, 0
    %p39 = por %p37, %p38
    %p40 = scmp.ne.s32.totalorder %s26, %s27
    %p41 = scmp.eq.s32.totalorder %s19, 1
    %p42 = por %p40, %p41
    %p44 = scmp.ne.s32.totalorder %s27, %s43
    %p45 = scmp.eq.s32.totalorder %s19, 0
    %p46 = por %p44, %p45
    %s48 = sadd.s32 %s47, 1
    %p51 = scmp.eq.s32.totalorder %s13, 1
    %p52 = scmp.ne.s32.totalorder %s47, %s49
    %p53 = scmp.eq.s32.totalorder %s13, 0
    %p54 = por %p52, %p53
    %p55 = scmp.ne.s32.totalorder %s47, %s49
    %p56 = scmp.eq.s32.totalorder %s18, 1
    %p57 = por %p55, %p56
    %p58 = scmp.ne.s32.totalorder %s49, %s50
    %p59 = scmp.eq.s32.totalorder %s18, 0
    %p60 = por %p58, %p59
    %p61 = scmp.ne.s32.totalorder %s49, %s50
    %p62 = scmp.eq.s32.totalorder %s19, 1
    %p63 = por %p61, %p62
    %p65 = scmp.ne.s32.totalorder %s50, %s64
    %p66 = scmp.eq.s32.totalorder %s19, 0
    %p67 = por %p65, %p66
    %s69 = sadd.s32 %s68, 1
    %p72 = scmp.eq.s32.totalorder %s13, 1
    %p73 = scmp.ne.s32.totalorder %s68, %s70
    %p74 = scmp.eq.s32.totalorder %s13, 0
    %p75 = por %p73, %p74
    %p76 = scmp.ne.s32.totalorder %s68, %s70
    %p77 = scmp.eq.s32.totalorder %s18, 1
    %p78 = por %p76, %p77
    %p79 = scmp.ne.s32.totalorder %s70, %s71
    %p80 = scmp.eq.s32.totalorder %s18, 0
    %p81 = por %p79, %p80
    %p82 = scmp.ne.s32.totalorder %s70, %s71
    %p83 = scmp.eq.s32.totalorder %s19, 1
    %p84 = por %p82, %p83
    %p86 = scmp.ne.s32.totalorder %s71, %s85
    %p87 = scmp.eq.s32.totalorder %s19, 0
    %p88 = por %p86, %p87
    %s90 = sadd.s32 %s89, 1
    %p93 = scmp.eq.s32.totalorder %s13, 1
    %p94 = scmp.ne.s32.totalorder %s89, %s91
    %p95 = scmp.eq.s32.totalorder %s13, 0
    %p96 = por %p94, %p95
    %p97 = scmp.ne.s32.totalorder %s89, %s91
    %p98 = scmp.eq.s32.totalorder %s18, 1
    %p99 = por %p97, %p98
    %p100 = scmp.ne.s32.totalorder %s91, %s92
    %p101 = scmp.eq.s32.totalorder %s18, 0
    %p102 = por %p100, %p101
    %p103 = scmp.ne.s32.totalorder %s91, %s92
    %p104 = scmp.eq.s32.totalorder %s19, 1
    %p105 = por %p103, %p104
    %p107 = scmp.ne.s32.totalorder %s92, %s106
    %p108 = scmp.eq.s32.totalorder %s19, 0
    %p109 = por %p107, %p108
    %s111 = sadd.s32 %s110, 1
    %p114 = scmp.eq.s32.totalorder %s13, 1
    %p115 = scmp.ne.s32.totalorder %s110, %s112
    %p116 = scmp.eq.s32.totalorder %s13, 0
    %p117 = por %p115, %p116
    %p118 = scmp.ne.s32.totalorder %s110, %s112
    %p119 = scmp.eq.s32.totalorder %s18, 1
    %p120 = por %p118, %p119
    %p121 = scmp.ne.s32.totalorder %s112, %s113
    %p122 = scmp.eq.s32.totalorder %s18, 0
    %p123 = por %p121, %p122
    %p124 = scmp.ne.s32.totalorder %s112, %s113
    %p125 = scmp.eq.s32.totalorder %s19, 1
    %p126 = por %p124, %p125
    %p128 = scmp.ne.s32.totalorder %s113, %s127
    %p129 = scmp.eq.s32.totalorder %s19, 0
    %p130 = por %p128, %p129
    %s132 = sadd.s32 %s131, 1
    %p135 = scmp.eq.s32.totalorder %s13, 1
    %p136 = scmp.ne.s32.totalorder %s131, %s133
    %p137 = scmp.eq.s32.totalorder %s13, 0
    %p138 = por %p136, %p137
    %p139 = scmp.ne.s32.totalorder %s131, %s133
    %p140 = scmp.eq.s32.totalorder %s18, 1
    %p141 = por %p139, %p140
    %p142 = scmp.ne.s32.totalorder %s133, %s134
    %p143 = scmp.eq.s32.totalorder %s18, 0
    %p144 = por %p142, %p143
    %p145 = scmp.ne.s32.totalorder %s133, %s134
    %p146 = scmp.eq.s32.totalorder %s19, 1
    %p147 = por %p145, %p146
    %p149 = scmp.ne.s32.totalorder %s134, %s148
    %p150 = scmp.eq.s32.totalorder %s19, 0
    %p151 = por %p149, %p150
    %s153 = sadd.s32 %s152, 1
    %p156 = scmp.eq.s32.totalorder %s13, 1
    %p157 = scmp.ne.s32.totalorder %s152, %s154
    %p158 = scmp.eq.s32.totalorder %s13, 0
    %p159 = por %p157, %p158
    %p160 = scmp.ne.s32.totalorder %s152, %s154
    %p161 = scmp.eq.s32.totalorder %s18, 1
    %p162 = por %p160, %p161
    %p163 = scmp.ne.s32.totalorder %s154, %s155
    %p164 = scmp.eq.s32.totalorder %s18, 0
    %p165 = por %p163, %p164
    %p166 = scmp.ne.s32.totalorder %s154, %s155
    %p167 = scmp.eq.s32.totalorder %s19, 1
    %p168 = por %p166, %p167
    %p170 = scmp.ne.s32.totalorder %s155, %s169
    %p171 = scmp.eq.s32.totalorder %s19, 0
    %p172 = por %p170, %p171
    %s173 = ssub.s32 %s13, %s20
    %p174 = scmp.eq.s32.totalorder %s173, 0
    %s176 = sadd.s32 %s175, 1
    %s177 = scalar_select %p174, %s175, %s176
    %p180 = pneg %p174
    %p181 = scmp.eq.s32.totalorder %s13, 1
    %p182 = por %p180, %p181
    %p183 = scmp.ne.s32.totalorder %s175, %s178
    %p184 = scmp.eq.s32.totalorder %s13, 0
    %p185 = por %p183, %p184
    %p186 = scmp.ne.s32.totalorder %s175, %s178
    %p187 = scmp.eq.s32.totalorder %s18, 1
    %p188 = por %p186, %p187
    %p189 = scmp.ne.s32.totalorder %s178, %s179
    %p190 = scmp.eq.s32.totalorder %s18, 0
    %p191 = por %p189, %p190
    %p192 = scmp.ne.s32.totalorder %s178, %s179
    %p193 = scmp.eq.s32.totalorder %s19, 1
    %p194 = por %p192, %p193
    %p196 = scmp.ne.s32.totalorder %s179, %s195
    %p197 = scmp.eq.s32.totalorder %s19, 0
    %p198 = por %p196, %p197
    %p199 = scmp.le.s32.totalorder 1, %s13
    %p200 = scmp.lt.s32.totalorder %s13, 3
    %p201 = pnand %p199, %p200
    %p202 = pneg %p201
    // Predicated region
    $region9: #{linear_regression_forward.1} parent=5 // pred_check
      _
    $region10: #{linear_regression_forward.1} parent=5 // pred_check_branch
      %204 = sbr.rel (%p201) target = $region12
    $region11: #{linear_regression_forward.1} parent=5 // pred_region
      %s205 = ssub.s32 %s13, 1
      // Predicated region
      $region13: #{linear_regression_forward.1} parent=11 // pred_check
        %p206 = pneg %p60
      $region14: #{linear_regression_forward.1} parent=11 // pred_check_branch
        %208 = sbr.rel (%p206) target = $region16
      $region15: #{linear_regression_forward.1} parent=11 // pred_region
        _
      $region16: #{linear_regression_forward.1} parent=11 // pred_fallthru
        _
      // Predicated region
      $region17: #{linear_regression_forward.1} parent=11 // pred_check
        %p209 = pneg %p81
      $region18: #{linear_regression_forward.1} parent=11 // pred_check_branch
        %211 = sbr.rel (%p209) target = $region20
      $region19: #{linear_regression_forward.1} parent=11 // pred_region
        _
      $region20: #{linear_regression_forward.1} parent=11 // pred_fallthru
        _
      // Predicated region
      $region21: #{linear_regression_forward.1} parent=11 // pred_check
        %p212 = pneg %p102
      $region22: #{linear_regression_forward.1} parent=11 // pred_check_branch
        %214 = sbr.rel (%p212) target = $region24
      $region23: #{linear_regression_forward.1} parent=11 // pred_region
        _
      $region24: #{linear_regression_forward.1} parent=11 // pred_fallthru
        _
      // Predicated region
      $region25: #{linear_regression_forward.1} parent=11 // pred_check
        %p215 = pneg %p123
      $region26: #{linear_regression_forward.1} parent=11 // pred_check_branch
        %217 = sbr.rel (%p215) target = $region28
      $region27: #{linear_regression_forward.1} parent=11 // pred_region
        _
      $region28: #{linear_regression_forward.1} parent=11 // pred_fallthru
        _
      // Predicated region
      $region29: #{linear_regression_forward.1} parent=11 // pred_check
        %p218 = pneg %p144
      $region30: #{linear_regression_forward.1} parent=11 // pred_check_branch
        %220 = sbr.rel (%p218) target = $region32
      $region31: #{linear_regression_forward.1} parent=11 // pred_region
        _
      $region32: #{linear_regression_forward.1} parent=11 // pred_fallthru
        _
      // Predicated region
      $region33: #{linear_regression_forward.1} parent=11 // pred_check
        %p221 = pneg %p165
      $region34: #{linear_regression_forward.1} parent=11 // pred_check_branch
        %223 = sbr.rel (%p221) target = $region36
      $region35: #{linear_regression_forward.1} parent=11 // pred_region
        _
      $region36: #{linear_regression_forward.1} parent=11 // pred_fallthru
        _
    $region12: #{linear_regression_forward.1} parent=5 // pred_fallthru
      _
    %p224 = scmp.lt.s32.totalorder %s13, 2
    // Predicated region
    $region37: #{linear_regression_forward.1} parent=5 // pred_check
      %p225 = pneg %p224
    $region38: #{linear_regression_forward.1} parent=5 // pred_check_branch
      %227 = sbr.rel (%p225) target = $region40
    $region39: #{linear_regression_forward.1} parent=5 // pred_region
      // Predicated region
      $region41: #{linear_regression_forward.1} parent=39 // pred_check
        %p228 = pneg %p33
      $region42: #{linear_regression_forward.1} parent=39 // pred_check_branch
        %230 = sbr.rel (%p228) target = $region44
      $region43: #{linear_regression_forward.1} parent=39 // pred_region
        %s231 = smul.u32 2, %s13
        %p232 = scmp.lt.s32.totalorder %s231, 3
        %s233 = scalar_select %p232, %s231, 3
        %s234 = smul.addr %s233, 4
        %s235 = scalar_lea.vmem %s0, %s234
        %s236 = smul.u32 2, %s13
      $region44: #{linear_regression_forward.1} parent=39 // pred_fallthru
        _
    $region40: #{linear_regression_forward.1} parent=5 // pred_fallthru
      _
    %p237 = scmp.le.s32.totalorder 1, %s13
    %p238 = scmp.lt.s32.totalorder %s13, 3
    %p239 = pnand %p237, %p238
    %p240 = pneg %p239
    // Predicated region
    $region45: #{linear_regression_forward.1} parent=5 // pred_check
      _
    $region46: #{linear_regression_forward.1} parent=5 // pred_check_branch
      %242 = sbr.rel (%p239) target = $region48
    $region47: #{linear_regression_forward.1} parent=5 // pred_region
      %s243 = ssub.s32 %s13, 1
      %s244 = smul.u32 2, %s18
      %p245 = scmp.lt.s32.totalorder %s244, 3
      %s246 = scalar_select %p245, %s244, 3
      %s247 = smul.addr %s246, 4
      %s248 = scalar_lea.vmem %s0, %s247
      %p249 = pneg %p39
      %p250 = pneg %p36
      %p251 = pneg %p60
      %p252 = pneg %p57
      %p253 = pneg %p81
      %p254 = pneg %p78
      %p255 = pneg %p102
      %p256 = pneg %p99
      %p257 = pneg %p123
      %p258 = pneg %p120
      %p259 = pneg %p144
      %p260 = pneg %p141
      %p261 = pneg %p165
      %p262 = pneg %p162
      %p263 = pneg %p191
      %p264 = pneg %p188
      %s265 = smul.u32 2, %s18
      %p266 = scmp.lt.s32.totalorder %s265, 3
      %s267 = scalar_select %p266, %s265, 3
      %s268 = smul.addr %s267, 8
      %s269 = scalar_lea.vmem %s7, %s268
      %s270 = smul.u32 2, %s18
      %p271 = scmp.lt.s32.totalorder %s270, 3
      %s272 = scalar_select %p271, %s270, 3
      %s273 = smul.addr %s272, 4
      %s274 = scalar_lea.vmem %s0, %s273
      %s275 = smul.u32 2, %s18
      %s276 = smul.u32 2, %s18
      %p277 = scmp.lt.s32.totalorder %s276, 3
      %s278 = scalar_select %p277, %s276, 3
      %s279 = smul.addr %s278, 8
      %s280 = scalar_lea.vmem %s7, %s279
      %s281 = smul.u32 2, %s18
      %v283 = vld [vmem:[%s274] sm:$0xf]
      %v284 = vld [vmem:[%s274 + $0x4] sm:$0xf]
      %v285 = vld [vmem:[%s1] sm:$0xf]
      %v286 = vld [vmem:[%s1 + $0x4] sm:$0xf]
      %v287 = vld [vmem:[%s2] sm:$0x1]
      %v289 = vlaneseq
      %v290 = vshrl.u32 %v289, 7
      %v291 = vsub.s32 0, %v290
      %v292 = vrot.slane %v287, %v291
      %v296 = vunpack.c.l.b16 %v283
      %v297 = vunpack.c.l.b16 %v284
      %v298 = vpack.c.b16 %v297, %v296
      %v301 = vunpack.c.l.b16 %v285
      %v302 = vunpack.c.l.b16 %v286
      %v303 = vpack.c.b16 %v302, %v301
      %vm305 = vcmask 130048
      %v307 = vsel %vm305, %v298, 0
      %309 = vmatprep.subr.bf16.mxu0 0
      %310 = vmatpush1.bf16.msra.mxu0 %v303
      %311 = vmatprep.subr.bf16.mxu0 0
      %312 = vmatpush1.bf16.msra.mxu0 0
      %313 = vmatprep.subr.bf16.mxu0 0
      %314 = vmatpush1.bf16.msra.mxu0 0
      %315 = vmatprep.subr.bf16.mxu0 0
      %316 = vmatpush1.bf16.msra.mxu0 0
      %317 = vmatprep.subr.bf16.mxu0 0
      %318 = vmatpush1.bf16.msra.mxu0 0
      %319 = vmatprep.subr.bf16.mxu0 0
      %320 = vmatpush1.bf16.msra.mxu0 0
      %321 = vmatprep.subr.bf16.mxu0 0
      %322 = vmatpush1.bf16.msra.mxu0 0
      %323 = vmatprep.subr.bf16.mxu0 0
      %324 = vmatpush1.bf16.msra.mxu0 0
      %325 = vmatprep.subr.bf16.mxu0 0
      %326 = vmatpush1.bf16.msra.mxu0 0
      %327 = vmatprep.subr.bf16.mxu0 0
      %328 = vmatpush1.bf16.msra.mxu0 0
      %329 = vmatprep.subr.bf16.mxu0 0
      %330 = vmatpush1.bf16.msra.mxu0 0
      %331 = vmatprep.subr.bf16.mxu0 0
      %332 = vmatpush1.bf16.msra.mxu0 0
      %333 = vmatprep.subr.bf16.mxu0 0
      %334 = vmatpush1.bf16.msra.mxu0 0
      %335 = vmatprep.subr.bf16.mxu0 0
      %336 = vmatpush1.bf16.msra.mxu0 0
      %337 = vmatprep.subr.bf16.mxu0 0
      %338 = vmatpush1.bf16.msra.mxu0 0
      %339 = vmatprep.subr.bf16.mxu0 0
      %340 = vmatpush1.bf16.msra.mxu0 0
      %341 = vmatprep.mubr.bf16.mxu0 0
      %342 = vmatmul.mubr.bf16.gmra.mrb[0].mxu0 %v307
      %v343 = vpop.f32.mrb[0].mxu0
      %v344 = vadd.f32 %v292, %v343
      %v345 = vpop.f32.mrb[0].mxu0
      %v346 = vpop.f32.mrb[0].mxu0
      %v347 = vadd.f32 %v292, %v346
      %v348 = vpop.f32.mrb[0].mxu0
      %349 = vdwg.mxu0
      %v350 = vxor.u32 %v344, 2147483648
      %v351 = vxor.u32 %v347, 2147483648
      %v352 = vmul.f32 %v350, 1.442695
      %v353 = vpow.pop %v352
      %v354 = vmul.f32 %v351, 1.442695
      %v355 = vpow.pop %v354
      %v356 = vadd.f32 %v353, 1.0
      %v357 = vadd.f32 %v355, 1.0
      %v358 = vrcp.pop %v356
      %v359 = vmul.f32 1.0, %v358
      %v360 = vrcp.pop %v357
      %v361 = vmul.f32 1.0, %v360
      %v362 = vpack.c.bf16 %v361, %v359
      %v363 = vld [vmem:[%s3] sm:$0xf]
      %v364 = vld [vmem:[%s3 + $0x4] sm:$0xf]
      %v365 = vld [vmem:[%s3 + $0x8] sm:$0xf]
      %v366 = vld [vmem:[%s3 + $0xc] sm:$0xf]
      %v367 = vld [vmem:[%s3 + $0x10] sm:$0xf]
      %v368 = vld [vmem:[%s3 + $0x14] sm:$0xf]
      %v369 = vld [vmem:[%s3 + $0x18] sm:$0xf]
      %v370 = vld [vmem:[%s3 + $0x1c] sm:$0xf]
      %v371 = vld [vmem:[%s4] sm:$0x1]
      %v373 = vlaneseq
      %v374 = vshrl.u32 %v373, 7
      %v375 = vsub.s32 0, %v374
      %v376 = vrot.slane %v371, %v375
      %v386 = vunpack.c.l.b16 %v363
      %v387 = vunpack.c.l.b16 %v364
      %v388 = vunpack.c.l.b16 %v365
      %v389 = vunpack.c.l.b16 %v366
      %v390 = vunpack.c.l.b16 %v367
      %v391 = vunpack.c.l.b16 %v368
      %v392 = vunpack.c.l.b16 %v369
      %v393 = vunpack.c.l.b16 %v370
      %v394 = vpack.c.b16 %v387, %v386
      %v395 = vpack.c.b16 %v389, %v388
      %v396 = vpack.c.b16 %v391, %v390
      %v397 = vpack.c.b16 %v393, %v392
      %vm402 = vcmask 523264
      %v404 = vsel %vm402, %v362, 0
      %406 = vmatprep.subr.bf16.mxu0 0
      %407 = vmatpush1.bf16.msra.mxu0 %v394
      %408 = vmatprep.subr.bf16.mxu0 0
      %409 = vmatpush1.bf16.msra.mxu0 %v395
      %410 = vmatprep.subr.bf16.mxu0 0
      %411 = vmatpush1.bf16.msra.mxu0 %v396
      %412 = vmatprep.subr.bf16.mxu0 0
      %413 = vmatpush1.bf16.msra.mxu0 %v397
      %414 = vmatprep.subr.bf16.mxu0 0
      %415 = vmatpush1.bf16.msra.mxu0 0
      %416 = vmatprep.subr.bf16.mxu0 0
      %417 = vmatpush1.bf16.msra.mxu0 0
      %418 = vmatprep.subr.bf16.mxu0 0
      %419 = vmatpush1.bf16.msra.mxu0 0
      %420 = vmatprep.subr.bf16.mxu0 0
      %421 = vmatpush1.bf16.msra.mxu0 0
      %422 = vmatprep.subr.bf16.mxu0 0
      %423 = vmatpush1.bf16.msra.mxu0 0
      %424 = vmatprep.subr.bf16.mxu0 0
      %425 = vmatpush1.bf16.msra.mxu0 0
      %426 = vmatprep.subr.bf16.mxu0 0
      %427 = vmatpush1.bf16.msra.mxu0 0
      %428 = vmatprep.subr.bf16.mxu0 0
      %429 = vmatpush1.bf16.msra.mxu0 0
      %430 = vmatprep.subr.bf16.mxu0 0
      %431 = vmatpush1.bf16.msra.mxu0 0
      %432 = vmatprep.subr.bf16.mxu0 0
      %433 = vmatpush1.bf16.msra.mxu0 0
      %434 = vmatprep.subr.bf16.mxu0 0
      %435 = vmatpush1.bf16.msra.mxu0 0
      %436 = vmatprep.subr.bf16.mxu0 0
      %437 = vmatpush1.bf16.msra.mxu0 0
      %438 = vmatprep.mubr.bf16.mxu0 0
      %439 = vmatmul.mubr.bf16.gmra.mrb[0].mxu0 %v404
      %v440 = vpop.f32.mrb[0].mxu0
      %v441 = vadd.f32 %v376, %v440
      %v442 = vpop.f32.mrb[0].mxu0
      %v443 = vpop.f32.mrb[0].mxu0
      %v444 = vadd.f32 %v376, %v443
      %v445 = vpop.f32.mrb[0].mxu0
      %446 = vdwg.mxu0
      %v447 = vxor.u32 %v441, 2147483648
      %v448 = vxor.u32 %v444, 2147483648
      %v449 = vmul.f32 %v447, 1.442695
      %v450 = vpow.pop %v449
      %v451 = vmul.f32 %v448, 1.442695
      %v452 = vpow.pop %v451
      %v453 = vadd.f32 %v450, 1.0
      %v454 = vadd.f32 %v452, 1.0
      %v455 = vrcp.pop %v453
      %v456 = vmul.f32 1.0, %v455
      %v457 = vrcp.pop %v454
      %v458 = vmul.f32 1.0, %v457
      %v459 = vpack.c.bf16 %v458, %v456
      %v460 = vld [vmem:[%s5] sm:$0xf]
      %v461 = vld [vmem:[%s5 + $0x4] sm:$0xf]
      %v462 = vld [vmem:[%s5 + $0x8] sm:$0xf]
      %v463 = vld [vmem:[%s5 + $0xc] sm:$0xf]
      %v464 = vld [vmem:[%s6] sm:$0x1]
      %v466 = vlaneseq
      %v467 = vshrl.u32 %v466, 7
      %v468 = vsub.s32 0, %v467
      %v469 = vrot.slane %v464, %v468
      %v475 = vunpack.c.l.b16 %v460
      %v476 = vunpack.c.l.b16 %v461
      %v477 = vunpack.c.l.b16 %v462
      %v478 = vunpack.c.l.b16 %v463
      %v479 = vpack.c.b16 %v476, %v475
      %v480 = vpack.c.b16 %v478, %v477
      %vm483 = vcmask 261120
      %v485 = vsel %vm483, %v459, 0
      %487 = vmatprep.subr.bf16.mxu0 0
      %488 = vmatpush1.bf16.msra.mxu0 %v479
      %489 = vmatprep.subr.bf16.mxu0 0
      %490 = vmatpush1.bf16.msra.mxu0 %v480
      %491 = vmatprep.subr.bf16.mxu0 0
      %492 = vmatpush1.bf16.msra.mxu0 0
      %493 = vmatprep.subr.bf16.mxu0 0
      %494 = vmatpush1.bf16.msra.mxu0 0
      %495 = vmatprep.subr.bf16.mxu0 0
      %496 = vmatpush1.bf16.msra.mxu0 0
      %497 = vmatprep.subr.bf16.mxu0 0
      %498 = vmatpush1.bf16.msra.mxu0 0
      %499 = vmatprep.subr.bf16.mxu0 0
      %500 = vmatpush1.bf16.msra.mxu0 0
      %501 = vmatprep.subr.bf16.mxu0 0
      %502 = vmatpush1.bf16.msra.mxu0 0
      %503 = vmatprep.subr.bf16.mxu0 0
      %504 = vmatpush1.bf16.msra.mxu0 0
      %505 = vmatprep.subr.bf16.mxu0 0
      %506 = vmatpush1.bf16.msra.mxu0 0
      %507 = vmatprep.subr.bf16.mxu0 0
      %508 = vmatpush1.bf16.msra.mxu0 0
      %509 = vmatprep.subr.bf16.mxu0 0
      %510 = vmatpush1.bf16.msra.mxu0 0
      %511 = vmatprep.subr.bf16.mxu0 0
      %512 = vmatpush1.bf16.msra.mxu0 0
      %513 = vmatprep.subr.bf16.mxu0 0
      %514 = vmatpush1.bf16.msra.mxu0 0
      %515 = vmatprep.subr.bf16.mxu0 0
      %516 = vmatpush1.bf16.msra.mxu0 0
      %517 = vmatprep.subr.bf16.mxu0 0
      %518 = vmatpush1.bf16.msra.mxu0 0
      %519 = vmatprep.mubr.bf16.mxu0 0
      %520 = vmatmul.mubr.bf16.gmra.mrb[0].mxu0 %v485
      %v521 = vpop.f32.mrb[0].mxu0
      %v522 = vadd.f32 %v469, %v521
      %v523 = vpop.f32.mrb[0].mxu0
      %v524 = vpop.f32.mrb[0].mxu0
      %v525 = vadd.f32 %v469, %v524
      %v526 = vpop.f32.mrb[0].mxu0
      %527 = vdwg.mxu0
      %vm528 = vcmask 31744
      %529 = vst.msk [vmem:[%s280] sm:$0xff] %vm528, %v522
      %530 = vst.msk [vmem:[%s280 + $0x8] sm:$0xff] %vm528, %v525
      %s531 = smul.u32 2, %s18
      %p532 = scmp.lt.s32.totalorder %s531, 3
      %s533 = scalar_select %p532, %s531, 3
      %s534 = smul.addr %s533, 8
      %s535 = scalar_lea.vmem %s7, %s534
      // Predicated region
      $region49: #{linear_regression_forward.1} parent=47 // pred_check
        %p536 = pneg %p188
      $region50: #{linear_regression_forward.1} parent=47 // pred_check_branch
        %538 = sbr.rel (%p536) target = $region52
      $region51: #{linear_regression_forward.1} parent=47 // pred_region
        %s539 = smul.u32 2, %s18
      $region52: #{linear_regression_forward.1} parent=47 // pred_fallthru
        _
    $region48: #{linear_regression_forward.1} parent=5 // pred_fallthru
      _
    %p540 = scmp.le.s32.totalorder 2, %s13
    // Predicated region
    $region53: #{linear_regression_forward.1} parent=5 // pred_check
      %p541 = pneg %p540
    $region54: #{linear_regression_forward.1} parent=5 // pred_check_branch
      %543 = sbr.rel (%p541) target = $region56
    $region55: #{linear_regression_forward.1} parent=5 // pred_region
      %s544 = ssub.s32 %s13, 2
      // Predicated region
      $region57: #{linear_regression_forward.1} parent=55 // pred_check
        %p545 = pneg %p194
      $region58: #{linear_regression_forward.1} parent=55 // pred_check_branch
        %547 = sbr.rel (%p545) target = $region60
      $region59: #{linear_regression_forward.1} parent=55 // pred_region
        %s548 = smul.u32 2, %s19
        %p549 = scmp.lt.s32.totalorder %s548, 3
        %s550 = scalar_select %p549, %s548, 3
        %s551 = smul.addr %s550, 8
        %s552 = scalar_lea.vmem %s7, %s551
      $region60: #{linear_regression_forward.1} parent=55 // pred_fallthru
        _
    $region56: #{linear_regression_forward.1} parent=5 // pred_fallthru
      _
  $region6: #{linear_regression_forward.1} parent=0 // loop_footer
    %s17 = sadd.s32 1, %s13
  $region7: #{linear_regression_forward.1} parent=0 // loop_footer_branch
    %12 = sbr.rel target = $region3
  $region8: #{linear_regression_forward.1} parent=0 // loop_exit
    _

</llo_original>
